<compile_context>
chip_gen: v5e
topology: v5e:2x2
jax: 0.10.0
libtpu: 0.0.40
codegen_flags: <defaults>
</compile_context>

<pallas_src>
import functools

import numpy as np
import jax
import jax.numpy as jnp
from jax.experimental import pallas as pl
from jax.experimental.pallas import tpu as pltpu

# ----------------------------- synthetic constants ---------------------------
LATENT_SIZE = 16
ENCODER_KERNEL_SIZE = 3
ENCODER_FILTERS = [8, 16]          # conv1: C->8, conv2: 8->16
ENCODER_DILATIONS = [1, 2]
ENCODER_DOWNSAMPLE = 4             # macro path: avg-pool by 4
DECODER_HIDDEN = 64
DECODER_INPUT_DROPOUT = 0.0        # only active when is_training=True
BN_EPS = 1e-5

IN_CHANNELS = 2                    # gaze (x, y)
SEQ_LEN = 32
BATCH = 2

# derived flat sizes
CT = IN_CHANNELS * SEQ_LEN                      # 64   (flattened input / reconstruction)
F1T = ENCODER_FILTERS[0] * SEQ_LEN              # 256  (conv1 output, flattened)
F2T = ENCODER_FILTERS[1] * SEQ_LEN              # 512  (conv2 output, flattened)
L2 = 2 * LATENT_SIZE                            # 32   (both latents, [macro | micro])
H = DECODER_HIDDEN                              # 64
SLAB_W = 512                                    # bias-slab lane width
OUT_W = 128                                     # lane-dense output width
ZC_LO, ZC_HI = CT, CT + L2                      # output lanes holding zc (64:96)

assert F1T <= SLAB_W and F2T <= SLAB_W and H + L2 <= OUT_W and CT + L2 <= OUT_W


# ------------------------------ Pallas kernel --------------------------------
def _forward_kernel(x_ref, a1_ref, a2_ref, wz_ref, wf1_ref, wcat_ref, slab_ref, out_ref):
    """Entire forward pass for one row-block:
       conv1 -> conv2 -> (pool+bn3 | bn1) -> fc1 (+ z pass-through) -> fc2 (+ z pass-through).

    Activations stay channel-major flattened (rows x lanes); every stage is a plain
    row-matmul on VMEM-resident operands, and the single 128-lane output row packs
    [reconstruction(64) | z_macro(16) | z_micro(16) | 0(32)]."""
    f32 = jnp.float32
    wdt = a1_ref.dtype                       # bf16 (or f32 for the structural check)

    # lane-aligned static slices out of the single bias/affine slab
    b1  = slab_ref[0:1, :F1T]                # conv1 bias, broadcast over time
    b2  = slab_ref[1:2, :F2T]                # conv2 bias
    bz  = slab_ref[2:3, 0:128]               # bottleneck Linear bias (128-padded)
    bns = slab_ref[2:3, 128:256]             # eval-BN scale  (0 in pad lanes)
    bnt = slab_ref[2:3, 256:384]             # eval-BN shift  (0 in pad lanes)
    bf1 = slab_ref[2:3, 384:512]             # fc1 bias (+0 for pass-through lanes)
    flo = slab_ref[3:4, 0:128]               # ReLU floor (0 on fc1 lanes, -1e30 on z lanes)
    bct = slab_ref[3:4, 128:256]             # fc2 bias (+0 for pass-through lanes)

    # encoder conv1 (+ ReLU): (TB, C*T) @ (C*T, F1*T)
    h1 = jnp.dot(x_ref[...].astype(wdt), a1_ref[...], preferred_element_type=f32) + b1
    h1 = jnp.maximum(h1, 0.0)

    # encoder conv2 (+ ReLU): (TB, F1*T) @ (F1*T, F2*T)
    h2 = jnp.dot(h1.astype(wdt), a2_ref[...], preferred_element_type=f32) + b2
    h2 = jnp.maximum(h2, 0.0)

    # both bottlenecks (macro pooling folded into the weight) in one 128-lane matmul:
    # lanes [0:L)=z_macro, [L:2L)=z_micro, rest 0.  ReLU + eval-BN affine epilogue.
    zc = jnp.dot(h2.astype(wdt), wz_ref[...], preferred_element_type=f32) + bz
    zc = jnp.maximum(zc, 0.0) * bns + bnt

    # decoder fc1; identity columns carry zc through to lanes [H:H+2L) untouched
    hz = jnp.dot(zc.astype(wdt), wf1_ref[...], preferred_element_type=f32) + bf1
    hz = jnp.maximum(hz, flo)                # ReLU on fc1 lanes, pass-through on z lanes

    # decoder fc2; identity rows place zc at output lanes [CT:CT+2L).  Single
    # unmasked 128-lane store.
    out_ref[...] = (jnp.dot(hz.astype(wdt), wcat_ref[...], preferred_element_type=f32)
                    + bct).astype(out_ref.dtype)


def _round_up(n, m):
    return (n + m - 1) // m * m


@functools.partial(jax.jit, static_argnames=("is_training",))
def autoencoder_forward(x, params, is_training=False):
    """Returns (out, z): out (B, C, T), z (2, B, latent) -- Autoencoder.forward."""
    # TODO(synk): reference Decoder body (teacher-forced TCN with input dropout) is not
    # in the provided source; inference-mode conditional MLP decoder is used and
    # is_training only gates (already-zero) dropout / frozen BN stats.
    del is_training
    B = x.shape[0]
    TB = 128 if B >= 128 else _round_up(max(B, 1), 8)   # >=8 rows: unmasked sublanes
    Bp = _round_up(B, TB)

    x_flat = x.reshape(B, CT).astype(jnp.float32)        # free row-major flatten (c*T+t)
    if Bp != B:
        x_flat = jnp.pad(x_flat, ((0, Bp - B), (0, 0)))

    p = params
    out128 = pl.pallas_call(
        _forward_kernel,
        out_shape=jax.ShapeDtypeStruct((Bp, OUT_W), jnp.float32),
        grid=(Bp // TB,),
        in_specs=[
            pl.BlockSpec((TB, CT), lambda i: (i, 0)),        # x row-block
            pl.BlockSpec((CT, F1T), lambda i: (0, 0)),       # a1   (VMEM-resident)
            pl.BlockSpec((F1T, F2T), lambda i: (0, 0)),      # a2
            pl.BlockSpec((F2T, 128), lambda i: (0, 0)),      # wz (both bottlenecks)
            pl.BlockSpec((128, 128), lambda i: (0, 0)),      # wf1 (+ z pass-through)
            pl.BlockSpec((128, 128), lambda i: (0, 0)),      # wcat (+ z pass-through)
            pl.BlockSpec((8, SLAB_W), lambda i: (0, 0)),     # bias/affine slab
        ],
        out_specs=pl.BlockSpec((TB, OUT_W), lambda i: (i, 0)),
        compiler_params=pltpu.CompilerParams(dimension_semantics=("parallel",)),
    )(x_flat, p["a1"], p["a2"], p["wz"], p["wf1"], p["wcat"], p["slab"])

    out = out128[:B, :CT].reshape(B, IN_CHANNELS, SEQ_LEN)
    zc = out128[:B, ZC_LO:ZC_HI]                          # [z_macro | z_micro]
    z = jnp.swapaxes(zc.reshape(B, 2, LATENT_SIZE), 0, 1)  # (2, B, L): [0]=macro, [1]=micro
    return out, z


# ----------------------- init-time parameter folding (host) -------------------
def _conv_as_matrix(w, bias, T, dilation):
    """PyTorch-style causal dilated Conv1d as a dense banded matrix.

    w: (F, C, K), bias: (F,).  Returns A (C*T, F*T) and b_ext (F*T,) such that the
    conv output flattened channel-major equals x_flat @ A + b_ext, with
    A[c*T + s, f*T + t] = w[f, c, k] when s = t - dilation*(K-1-k) >= 0."""
    w = np.asarray(w, np.float32)
    bias = np.asarray(bias, np.float32)
    F, C, K = w.shape
    A = np.zeros((C * T, F * T), np.float32)
    rows = np.arange(C)[:, None] * T
    cols = np.arange(F)[None, :] * T
    for k in range(K):
        shift = dilation * (K - 1 - k)
        wk = w[:, :, k].T                          # (C, F)
        for t in range(shift, T):
            A[rows + (t - shift), cols + t] += wk
    return A, np.repeat(bias, T)


def fold_params(raw, weight_dtype=jnp.bfloat16):
    """One-time host folding of conv structure, 4x avg-pool, flatten ordering,
    bottleneck concat, eval-BN affine, decoder weights and the lane-dense output
    packing into kernel-ready matrices (weights in `weight_dtype`, epilogue in f32)."""
    T, DS = SEQ_LEN, ENCODER_DOWNSAMPLE
    Tm = T // DS
    F2 = ENCODER_FILTERS[1]
    L = LATENT_SIZE

    a1, b1 = _conv_as_matrix(raw["conv1_w"], raw["conv1_b"], T, ENCODER_DILATIONS[0])
    a2, b2 = _conv_as_matrix(raw["conv2_w"], raw["conv2_b"], T, ENCODER_DILATIONS[1])

    # level '1' (micro): plain Linear on the (B, F2*T) flatten.
    w1_eff = np.asarray(raw["bn1_w"], np.float32).T                      # (F2T, L)
    # level '3' (macro): fold the 4x average pool into the Linear weight.
    w3_t = np.asarray(raw["bn3_w"], np.float32).T                        # (F2*Tm, L)
    w3_eff = np.repeat(w3_t.reshape(F2, Tm, L), DS, axis=1).reshape(F2T, L) / DS

    # both bottlenecks, padded to 128 lanes: cols [0:L)=macro ('3'), [L:2L)=micro ('1')
    wz = np.zeros((F2T, 128), np.float32)
    wz[:, :L] = w3_eff
    wz[:, L:L2] = w1_eff
    bz = np.zeros((128,), np.float32)
    bz[:L] = np.asarray(raw["bn3_b"], np.float32)
    bz[L:L2] = np.asarray(raw["bn1_b"], np.float32)

    def bn_affine(pfx):
        g = np.asarray(raw[pfx + "_gamma"], np.float32)
        b = np.asarray(raw[pfx + "_beta"], np.float32)
        m = np.asarray(raw[pfx + "_mean"], np.float32)
        v = np.asarray(raw[pfx + "_var"], np.float32)
        s = g / np.sqrt(v + BN_EPS)
        return s, b - m * s

    s3, t3 = bn_affine("bn3")
    s1, t1 = bn_affine("bn1")
    bns = np.zeros((128,), np.float32); bns[:L] = s3; bns[L:L2] = s1     # 0 in pad lanes
    bnt = np.zeros((128,), np.float32); bnt[:L] = t3; bnt[L:L2] = t1

    # decoder fc1 extended with identity pass-through of zc to lanes [H:H+2L)
    wf1 = np.zeros((128, 128), np.float32)
    wf1[:L2, :H] = np.asarray(raw["fc1_w"], np.float32).T                # (2L, H)
    wf1[:L2, H:H + L2] = np.eye(L2, dtype=np.float32)
    bf1 = np.zeros((128,), np.float32); bf1[:H] = np.asarray(raw["fc1_b"], np.float32)
    floor = np.zeros((128,), np.float32); floor[H:H + L2] = -1e30        # skip ReLU on z lanes

    # decoder fc2 extended with identity pass-through of zc to output lanes [CT:CT+2L)
    wcat = np.zeros((128, 128), np.float32)
    wcat[:H, :CT] = np.asarray(raw["fc2_w"], np.float32).T               # (H, CT)
    wcat[H:H + L2, ZC_LO:ZC_HI] = np.eye(L2, dtype=np.float32)
    bcat = np.zeros((128,), np.float32); bcat[:CT] = np.asarray(raw["fc2_b"], np.float32)

    # single lane-aligned bias/affine slab (f32): one DMA instead of seven tiny ones
    slab = np.zeros((8, SLAB_W), np.float32)
    slab[0, :F1T] = b1
    slab[1, :F2T] = b2
    slab[2, 0:128] = bz
    slab[2, 128:256] = bns
    slab[2, 256:384] = bnt
    slab[2, 384:512] = bf1
    slab[3, 0:128] = floor
    slab[3, 128:256] = bcat

    return {
        "a1": jnp.asarray(a1, weight_dtype),
        "a2": jnp.asarray(a2, weight_dtype),
        "wz": jnp.asarray(wz, weight_dtype),
        "wf1": jnp.asarray(wf1, weight_dtype),
        "wcat": jnp.asarray(wcat, weight_dtype),
        "slab": jnp.asarray(slab, jnp.float32),
    }


# ------------------------------ parameter init --------------------------------
def init_params(key):
    ks = jax.random.split(key, 10)
    F1, F2, K = ENCODER_FILTERS[0], ENCODER_FILTERS[1], ENCODER_KERNEL_SIZE
    in_dim1 = F2 * SEQ_LEN
    in_dim3 = F2 * (SEQ_LEN // ENCODER_DOWNSAMPLE)

    def lin(k, o, i):
        return 0.1 * jax.random.normal(k, (o, i), jnp.float32)

    return {
        "conv1_w": 0.2 * jax.random.normal(ks[0], (F1, IN_CHANNELS, K), jnp.float32),
        "conv1_b": jnp.zeros((F1,), jnp.float32),
        "conv2_w": 0.2 * jax.random.normal(ks[1], (F2, F1, K), jnp.float32),
        "conv2_b": jnp.zeros((F2,), jnp.float32),
        "bn1_w": lin(ks[2], LATENT_SIZE, in_dim1),
        "bn1_b": jnp.zeros((LATENT_SIZE,), jnp.float32),
        "bn1_gamma": 1.0 + 0.1 * jax.random.normal(ks[3], (LATENT_SIZE,), jnp.float32),
        "bn1_beta": 0.1 * jax.random.normal(ks[4], (LATENT_SIZE,), jnp.float32),
        "bn1_mean": jnp.zeros((LATENT_SIZE,), jnp.float32),
        "bn1_var": jnp.ones((LATENT_SIZE,), jnp.float32),
        "bn3_w": lin(ks[5], LATENT_SIZE, in_dim3),
        "bn3_b": jnp.zeros((LATENT_SIZE,), jnp.float32),
        "bn3_gamma": 1.0 + 0.1 * jax.random.normal(ks[6], (LATENT_SIZE,), jnp.float32),
        "bn3_beta": 0.1 * jax.random.normal(ks[7], (LATENT_SIZE,), jnp.float32),
        "bn3_mean": jnp.zeros((LATENT_SIZE,), jnp.float32),
        "bn3_var": jnp.ones((LATENT_SIZE,), jnp.float32),
        "fc1_w": lin(ks[8], DECODER_HIDDEN, 2 * LATENT_SIZE),
        "fc1_b": jnp.zeros((DECODER_HIDDEN,), jnp.float32),
        "fc2_w": lin(ks[9], IN_CHANNELS * SEQ_LEN, DECODER_HIDDEN),
        "fc2_b": jnp.zeros((IN_CHANNELS * SEQ_LEN,), jnp.float32),
    }


# ----------------------- plain-JAX reference (for self-check) -----------------
def _reference_forward(x, raw):
    def conv(v, w, b, d):
        Bv, Cv, Tv = v.shape
        Fv, _, Kv = w.shape
        vp = jnp.pad(v, ((0, 0), (0, 0), (d * (Kv - 1), 0)))
        idx = jnp.arange(Tv)[:, None] + d * jnp.arange(Kv)[None, :]
        patches = vp[:, :, idx]                                  # (B, C, T, K)
        y = jnp.einsum("bctk,fck->bft", patches, w) + b[None, :, None]
        return jnp.maximum(y, 0.0)

    h = conv(x, raw["conv1_w"], raw["conv1_b"], ENCODER_DILATIONS[0])
    h = conv(h, raw["conv2_w"], raw["conv2_b"], ENCODER_DILATIONS[1])
    B, F, T = h.shape
    micro = h.reshape(B, -1)
    macro = h.reshape(B, F, T // ENCODER_DOWNSAMPLE, ENCODER_DOWNSAMPLE).mean(-1)
    macro = macro.reshape(B, -1)

    def bottleneck(v, pfx):
        y = jnp.maximum(v @ raw[pfx + "_w"].T + raw[pfx + "_b"], 0.0)
        s = raw[pfx + "_gamma"] / jnp.sqrt(raw[pfx + "_var"] + BN_EPS)
        return y * s + (raw[pfx + "_beta"] - raw[pfx + "_mean"] * s)

    z1 = bottleneck(micro, "bn1")
    z2 = bottleneck(macro, "bn3")
    z = jnp.stack([z2, z1], axis=0)
    zin = jnp.concatenate([z[0], z[1]], axis=-1)
    hd = jnp.maximum(zin @ raw["fc1_w"].T + raw["fc1_b"], 0.0)
    o = hd @ raw["fc2_w"].T + raw["fc2_b"]
    return o.reshape(B, IN_CHANNELS, SEQ_LEN), z


# ----------------------------------- main -------------------------------------
if __name__ == "__main__":
    key = jax.random.PRNGKey(0)
    kx, kp = jax.random.split(key)
    x = jax.random.normal(kx, (BATCH, IN_CHANNELS, SEQ_LEN), jnp.float32)

    raw = init_params(kp)
    params = fold_params(raw, weight_dtype=jnp.bfloat16)   # production path (bf16 weights)

    out, z = autoencoder_forward(x, params)
    jax.block_until_ready((out, z))

    assert out.shape == (BATCH, IN_CHANNELS, SEQ_LEN)
    assert z.shape == (2, BATCH, LATENT_SIZE)

    with jax.default_matmul_precision("highest"):
        ref_out, ref_z = _reference_forward(x, raw)

    # structural correctness check with f32 weights (same tolerance that was
    # validated previously; catches transposed-weight / column-order bugs).
    params_f32 = fold_params(raw, weight_dtype=jnp.float32)
    out32, z32 = autoencoder_forward(x, params_f32)
    jax.block_until_ready((out32, z32))
    np.testing.assert_allclose(np.asarray(out32), np.asarray(ref_out), rtol=2e-2, atol=2e-2)
    np.testing.assert_allclose(np.asarray(z32), np.asarray(ref_z), rtol=2e-2, atol=2e-2)

    # bf16-weight production path: f32 accumulation kept, tolerance re-tuned for
    # the bf16 weight/activation quantization only.
    np.testing.assert_allclose(np.asarray(out), np.asarray(ref_out), rtol=5e-2, atol=5e-2)
    np.testing.assert_allclose(np.asarray(z), np.asarray(ref_z), rtol=5e-2, atol=5e-2)

    print("KERNEL_OK")
</pallas_src>

<mosaic_0001>
module attributes {stable_mosaic.version = 11 : i64} {
  func.func @_forward_kernel(%arg0: i32, %arg1: memref<8x64xf32, #tpu.memory_space<vmem>>, %arg2: memref<64x256xbf16, #tpu.memory_space<vmem>>, %arg3: memref<256x512xbf16, #tpu.memory_space<vmem>>, %arg4: memref<512x128xbf16, #tpu.memory_space<vmem>>, %arg5: memref<128x128xbf16, #tpu.memory_space<vmem>>, %arg6: memref<128x128xbf16, #tpu.memory_space<vmem>>, %arg7: memref<8x512xf32, #tpu.memory_space<vmem>>, %arg8: memref<8x128xf32, #tpu.memory_space<vmem>>) attributes {dimension_semantics = [#tpu.dimension_semantics<parallel>], iteration_bounds = array<i64: 1>, scalar_prefetch = 0 : i64, scratch_operands = 0 : i64, tpu.core_type = #tpu.core_type<tc>, window_params = [{transform_indices = @transform_0, window_bounds = array<i64: 8, 64>}, {pipeline_mode = #tpu.pipeline_mode<synchronous>, transform_indices = @transform_1, window_bounds = array<i64: 64, 256>}, {pipeline_mode = #tpu.pipeline_mode<synchronous>, transform_indices = @transform_2, window_bounds = array<i64: 256, 512>}, {pipeline_mode = #tpu.pipeline_mode<synchronous>, transform_indices = @transform_3, window_bounds = array<i64: 512, 128>}, {pipeline_mode = #tpu.pipeline_mode<synchronous>, transform_indices = @transform_4, window_bounds = array<i64: 128, 128>}, {pipeline_mode = #tpu.pipeline_mode<synchronous>, transform_indices = @transform_5, window_bounds = array<i64: 128, 128>}, {pipeline_mode = #tpu.pipeline_mode<synchronous>, transform_indices = @transform_6, window_bounds = array<i64: 8, 512>}, {transform_indices = @transform_7, window_bounds = array<i64: 8, 128>}]} {
    %c0 = arith.constant 0 : index
    %c0_0 = arith.constant 0 : index
    %0 = vector.load %arg7[%c0, %c0_0] : memref<8x512xf32, #tpu.memory_space<vmem>>, vector<1x256xf32>
    %c1 = arith.constant 1 : index
    %c0_1 = arith.constant 0 : index
    %1 = vector.load %arg7[%c1, %c0_1] : memref<8x512xf32, #tpu.memory_space<vmem>>, vector<1x512xf32>
    %c2 = arith.constant 2 : index
    %c0_2 = arith.constant 0 : index
    %2 = vector.load %arg7[%c2, %c0_2] : memref<8x512xf32, #tpu.memory_space<vmem>>, vector<1x128xf32>
    %c2_3 = arith.constant 2 : index
    %c128 = arith.constant 128 : index
    %3 = vector.load %arg7[%c2_3, %c128] : memref<8x512xf32, #tpu.memory_space<vmem>>, vector<1x128xf32>
    %c2_4 = arith.constant 2 : index
    %c256 = arith.constant 256 : index
    %4 = vector.load %arg7[%c2_4, %c256] : memref<8x512xf32, #tpu.memory_space<vmem>>, vector<1x128xf32>
    %c2_5 = arith.constant 2 : index
    %c384 = arith.constant 384 : index
    %5 = vector.load %arg7[%c2_5, %c384] : memref<8x512xf32, #tpu.memory_space<vmem>>, vector<1x128xf32>
    %c3 = arith.constant 3 : index
    %c0_6 = arith.constant 0 : index
    %6 = vector.load %arg7[%c3, %c0_6] : memref<8x512xf32, #tpu.memory_space<vmem>>, vector<1x128xf32>
    %c3_7 = arith.constant 3 : index
    %c128_8 = arith.constant 128 : index
    %7 = vector.load %arg7[%c3_7, %c128_8] : memref<8x512xf32, #tpu.memory_space<vmem>>, vector<1x128xf32>
    %c0_9 = arith.constant 0 : index
    %c0_10 = arith.constant 0 : index
    %8 = vector.load %arg1[%c0_9, %c0_10] : memref<8x64xf32, #tpu.memory_space<vmem>>, vector<8x64xf32>
    %9 = arith.truncf %8 : vector<8x64xf32> to vector<8x64xbf16>
    %c0_11 = arith.constant 0 : index
    %c0_12 = arith.constant 0 : index
    %10 = vector.load %arg2[%c0_11, %c0_12] : memref<64x256xbf16, #tpu.memory_space<vmem>>, vector<64x256xbf16>
    %cst = arith.constant dense<0.000000e+00> : vector<8x256xf32>
    %11 = tpu.matmul %9, %10, %cst {dimension_numbers = #tpu.dot_dimension_numbers<[1], [0], [0], [1], [0, 0, 1, 1], [], []>} : vector<8x64xbf16>, vector<64x256xbf16>, vector<8x256xf32> -> vector<8x256xf32>
    %12 = vector.broadcast %0 : vector<1x256xf32> to vector<8x256xf32>
    %13 = arith.addf %11, %12 : vector<8x256xf32>
    %cst_13 = arith.constant 0.000000e+00 : f32
    %14 = vector.broadcast %cst_13 : f32 to vector<8x256xf32>
    %15 = arith.maximumf %13, %14 : vector<8x256xf32>
    %16 = arith.truncf %15 : vector<8x256xf32> to vector<8x256xbf16>
    %c0_14 = arith.constant 0 : index
    %c0_15 = arith.constant 0 : index
    %17 = vector.load %arg3[%c0_14, %c0_15] : memref<256x512xbf16, #tpu.memory_space<vmem>>, vector<256x512xbf16>
    %cst_16 = arith.constant dense<0.000000e+00> : vector<8x512xf32>
    %18 = tpu.matmul %16, %17, %cst_16 {dimension_numbers = #tpu.dot_dimension_numbers<[1], [0], [0], [1], [0, 0, 1, 1], [], []>} : vector<8x256xbf16>, vector<256x512xbf16>, vector<8x512xf32> -> vector<8x512xf32>
    %19 = vector.broadcast %1 : vector<1x512xf32> to vector<8x512xf32>
    %20 = arith.addf %18, %19 : vector<8x512xf32>
    %cst_17 = arith.constant 0.000000e+00 : f32
    %21 = vector.broadcast %cst_17 : f32 to vector<8x512xf32>
    %22 = arith.maximumf %20, %21 : vector<8x512xf32>
    %23 = arith.truncf %22 : vector<8x512xf32> to vector<8x512xbf16>
    %c0_18 = arith.constant 0 : index
    %c0_19 = arith.constant 0 : index
    %24 = vector.load %arg4[%c0_18, %c0_19] : memref<512x128xbf16, #tpu.memory_space<vmem>>, vector<512x128xbf16>
    %cst_20 = arith.constant dense<0.000000e+00> : vector<8x128xf32>
    %25 = tpu.matmul %23, %24, %cst_20 {dimension_numbers = #tpu.dot_dimension_numbers<[1], [0], [0], [1], [0, 0, 1, 1], [], []>} : vector<8x512xbf16>, vector<512x128xbf16>, vector<8x128xf32> -> vector<8x128xf32>
    %26 = vector.broadcast %2 : vector<1x128xf32> to vector<8x128xf32>
    %27 = arith.addf %25, %26 : vector<8x128xf32>
    %cst_21 = arith.constant 0.000000e+00 : f32
    %28 = vector.broadcast %cst_21 : f32 to vector<8x128xf32>
    %29 = arith.maximumf %27, %28 : vector<8x128xf32>
    %30 = vector.broadcast %3 : vector<1x128xf32> to vector<8x128xf32>
    %31 = arith.mulf %29, %30 : vector<8x128xf32>
    %32 = vector.broadcast %4 : vector<1x128xf32> to vector<8x128xf32>
    %33 = arith.addf %31, %32 : vector<8x128xf32>
    %34 = arith.truncf %33 : vector<8x128xf32> to vector<8x128xbf16>
    %c0_22 = arith.constant 0 : index
    %c0_23 = arith.constant 0 : index
    %35 = vector.load %arg5[%c0_22, %c0_23] : memref<128x128xbf16, #tpu.memory_space<vmem>>, vector<128x128xbf16>
    %cst_24 = arith.constant dense<0.000000e+00> : vector<8x128xf32>
    %36 = tpu.matmul %34, %35, %cst_24 {dimension_numbers = #tpu.dot_dimension_numbers<[1], [0], [0], [1], [0, 0, 1, 1], [], []>} : vector<8x128xbf16>, vector<128x128xbf16>, vector<8x128xf32> -> vector<8x128xf32>
    %37 = vector.broadcast %5 : vector<1x128xf32> to vector<8x128xf32>
    %38 = arith.addf %36, %37 : vector<8x128xf32>
    %39 = vector.broadcast %6 : vector<1x128xf32> to vector<8x128xf32>
    %40 = arith.maximumf %38, %39 : vector<8x128xf32>
    %41 = arith.truncf %40 : vector<8x128xf32> to vector<8x128xbf16>
    %c0_25 = arith.constant 0 : index
    %c0_26 = arith.constant 0 : index
    %42 = vector.load %arg6[%c0_25, %c0_26] : memref<128x128xbf16, #tpu.memory_space<vmem>>, vector<128x128xbf16>
    %cst_27 = arith.constant dense<0.000000e+00> : vector<8x128xf32>
    %43 = tpu.matmul %41, %42, %cst_27 {dimension_numbers = #tpu.dot_dimension_numbers<[1], [0], [0], [1], [0, 0, 1, 1], [], []>} : vector<8x128xbf16>, vector<128x128xbf16>, vector<8x128xf32> -> vector<8x128xf32>
    %44 = vector.broadcast %7 : vector<1x128xf32> to vector<8x128xf32>
    %45 = arith.addf %43, %44 : vector<8x128xf32>
    %c0_28 = arith.constant 0 : index
    %c0_29 = arith.constant 0 : index
    %46 = vector.load %arg8[%c0_28, %c0_29] : memref<8x128xf32, #tpu.memory_space<vmem>>, vector<8x128xf32>
    tpu.vector_store %arg8[%c0_28, %c0_29], %45 {strides = array<i32>} : memref<8x128xf32, #tpu.memory_space<vmem>>, vector<8x128xf32>,
    return
  }
  func.func @transform_0(%arg0: i32) -> (i32, i32) {
    %c0_i32 = arith.constant 0 : i32
    %c0_i32_0 = arith.constant 0 : i32
    return %arg0, %c0_i32 : i32, i32
  }
  func.func @transform_1(%arg0: i32) -> (i32, i32) {
    %c0_i32 = arith.constant 0 : i32
    %c0_i32_0 = arith.constant 0 : i32
    %c0_i32_1 = arith.constant 0 : i32
    return %c0_i32, %c0_i32_0 : i32, i32
  }
  func.func @transform_2(%arg0: i32) -> (i32, i32) {
    %c0_i32 = arith.constant 0 : i32
    %c0_i32_0 = arith.constant 0 : i32
    %c0_i32_1 = arith.constant 0 : i32
    return %c0_i32, %c0_i32_0 : i32, i32
  }
  func.func @transform_3(%arg0: i32) -> (i32, i32) {
    %c0_i32 = arith.constant 0 : i32
    %c0_i32_0 = arith.constant 0 : i32
    %c0_i32_1 = arith.constant 0 : i32
    return %c0_i32, %c0_i32_0 : i32, i32
  }
  func.func @transform_4(%arg0: i32) -> (i32, i32) {
    %c0_i32 = arith.constant 0 : i32
    %c0_i32_0 = arith.constant 0 : i32
    %c0_i32_1 = arith.constant 0 : i32
    return %c0_i32, %c0_i32_0 : i32, i32
  }
  func.func @transform_5(%arg0: i32) -> (i32, i32) {
    %c0_i32 = arith.constant 0 : i32
    %c0_i32_0 = arith.constant 0 : i32
    %c0_i32_1 = arith.constant 0 : i32
    return %c0_i32, %c0_i32_0 : i32, i32
  }
  func.func @transform_6(%arg0: i32) -> (i32, i32) {
    %c0_i32 = arith.constant 0 : i32
    %c0_i32_0 = arith.constant 0 : i32
    %c0_i32_1 = arith.constant 0 : i32
    return %c0_i32, %c0_i32_0 : i32, i32
  }
  func.func @transform_7(%arg0: i32) -> (i32, i32) {
    %c0_i32 = arith.constant 0 : i32
    %c0_i32_0 = arith.constant 0 : i32
    return %arg0, %c0_i32 : i32, i32
  }
}

</mosaic_0001>

<llo_original>
// kernel: autoencoder_forward.1
$region0: #{autoencoder_forward.1}
  #allocation0 [shape = 'u32[]', space=smem, size = 0x4, offset = 0x4, fixed_abs, tag = 'smem constant byte address 0x4 - core index']
  #allocation1 [shape = 'u32[72,128]{1,0:T(1,128)}', space=vmem, size = 0x9000, scoped, tag = 'internal scratch']
  %s0 = inlined_call_operand.vmem [shape: f32[8,64], index: 0, kind: input, shape index: {}]
  %s1 = inlined_call_operand.hbm [shape: bf16[64,256], index: 1, kind: input, shape index: {}]
  %s2 = inlined_call_operand.hbm [shape: bf16[256,512], index: 2, kind: input, shape index: {}]
  %s3 = inlined_call_operand.hbm [shape: bf16[512,128], index: 3, kind: input, shape index: {}]
  %s4 = inlined_call_operand.hbm [shape: bf16[128,128], index: 4, kind: input, shape index: {}]
  %s5 = inlined_call_operand.hbm [shape: bf16[128,128], index: 5, kind: input, shape index: {}]
  %s6 = inlined_call_operand.hbm [shape: f32[8,512], index: 6, kind: input, shape index: {}]
  %s7 = inlined_call_operand.vmem [shape: f32[8,128], index: 7, kind: output, shape index: {}]
  %s8 = sld [smem:[#allocation0]]
  $region62: #{autoencoder_forward.1} parent=0
    _
  %s10 = ssub.s32 1, %s8
  %s11 = scalar_select 0, %s10, %s8
  $region1: #{autoencoder_forward.1} parent=0
    #allocation2 [shape = 'u8[32768]{0}', space=vmem, size = 0x8000, scoped, tag = 'input window, operand 1, single buffered']
    #allocation3 [shape = 's32[1]{0}', space=sflag, size = 0x4, scoped, tag = 'scoped memory for autoencoder_forward.1']
    #allocation4 [shape = 'u8[262144]{0}', space=vmem, size = 0x40000, scoped, tag = 'input window, operand 2, single buffered']
    #allocation5 [shape = 's32[1]{0}', space=sflag, size = 0x4, scoped, tag = 'scoped memory for autoencoder_forward.1']
    #allocation6 [shape = 'u8[131072]{0}', space=vmem, size = 0x20000, scoped, tag = 'input window, operand 3, single buffered']
    #allocation7 [shape = 'u8[32768]{0}', space=vmem, size = 0x8000, scoped, tag = 'input window, operand 4, single buffered']
    #allocation8 [shape = 's32[1]{0}', space=sflag, size = 0x4, scoped, tag = 'scoped memory for autoencoder_forward.1']
    #allocation9 [shape = 'u8[32768]{0}', space=vmem, size = 0x8000, scoped, tag = 'input window, operand 5, single buffered']
    #allocation10 [shape = 'u8[16384]{0}', space=vmem, size = 0x4000, scoped, tag = 'input window, operand 6, single buffered']
    #allocation11 [shape = 's32[1]{0}', space=sflag, size = 0x4, scoped, tag = 'scoped memory for autoencoder_forward.1']
    %12 = vsyncpa [#allocation3], 0
    %13 = vsyncpa [#allocation5], 0
    %14 = vsyncpa [#allocation8], 0
    %15 = vsyncpa [#allocation11], 0
    // Predicated region
    $region2: #{autoencoder_forward.1} parent=1 // pred_check
      _
    $region3: #{autoencoder_forward.1} parent=1 // pred_check_branch
      %17 = sbr.rel (0) target = $region5
    $region4: #{autoencoder_forward.1} parent=1 // pred_region
      _
    $region5: #{autoencoder_forward.1} parent=1 // pred_fallthru
      _
    // Predicated region
    $region6: #{autoencoder_forward.1} parent=1 // pred_check
      _
    $region7: #{autoencoder_forward.1} parent=1 // pred_check_branch
      %19 = sbr.rel (0) target = $region9
    $region8: #{autoencoder_forward.1} parent=1 // pred_region
      %21 = vsyncadd [#allocation3], 0
      %s22 = sshll.u32 %s1, 4
      %s23 = int_to_ptr.hbm [resolvable:$true] %s22
      %s24 = sshll.u32 [#allocation2], 4
      %s25 = int_to_ptr.vmem [resolvable:$true] %s24
      %30 = dma.hbm_to_vmem [thread:$0]  %s23, 1024, %s25, [#allocation3], 128, 128, 8
    $region9: #{autoencoder_forward.1} parent=1 // pred_fallthru
      _
    // Predicated region
    $region10: #{autoencoder_forward.1} parent=1 // pred_check
      _
    $region11: #{autoencoder_forward.1} parent=1 // pred_check_branch
      %32 = sbr.rel (0) target = $region13
    $region12: #{autoencoder_forward.1} parent=1 // pred_region
      %34 = vsyncadd [#allocation5], 0
      %s35 = sshll.u32 %s2, 4
      %s36 = int_to_ptr.hbm [resolvable:$true] %s35
      %s37 = sshll.u32 [#allocation4], 4
      %s38 = int_to_ptr.vmem [resolvable:$true] %s37
      %43 = dma.hbm_to_vmem [thread:$0]  %s36, 8192, %s38, [#allocation5], 256, 256, 16
    $region13: #{autoencoder_forward.1} parent=1 // pred_fallthru
      _
    // Predicated region
    $region14: #{autoencoder_forward.1} parent=1 // pred_check
      _
    $region15: #{autoencoder_forward.1} parent=1 // pred_check_branch
      %45 = sbr.rel (0) target = $region17
    $region16: #{autoencoder_forward.1} parent=1 // pred_region
      %47 = vsyncadd [#allocation5], 0
      %s48 = sshll.u32 %s3, 4
      %s49 = int_to_ptr.hbm [resolvable:$true] %s48
      %s50 = sshll.u32 [#allocation6], 4
      %s51 = int_to_ptr.vmem [resolvable:$true] %s50
      %56 = dma.hbm_to_vmem [thread:$0]  %s49, 4096, %s51, [#allocation5], 64, 64, 4
    $region17: #{autoencoder_forward.1} parent=1 // pred_fallthru
      _
    // Predicated region
    $region18: #{autoencoder_forward.1} parent=1 // pred_check
      _
    $region19: #{autoencoder_forward.1} parent=1 // pred_check_branch
      %58 = sbr.rel (0) target = $region21
    $region20: #{autoencoder_forward.1} parent=1 // pred_region
      %60 = vsyncadd [#allocation8], 0
      %s61 = sshll.u32 %s4, 4
      %s62 = int_to_ptr.hbm [resolvable:$true] %s61
      %s63 = sshll.u32 [#allocation7], 4
      %s64 = int_to_ptr.vmem [resolvable:$true] %s63
      %69 = dma.hbm_to_vmem [thread:$0]  %s62, 1024, %s64, [#allocation8], 64, 64, 4
    $region21: #{autoencoder_forward.1} parent=1 // pred_fallthru
      _
    // Predicated region
    $region22: #{autoencoder_forward.1} parent=1 // pred_check
      _
    $region23: #{autoencoder_forward.1} parent=1 // pred_check_branch
      %71 = sbr.rel (0) target = $region25
    $region24: #{autoencoder_forward.1} parent=1 // pred_region
      %73 = vsyncadd [#allocation8], 0
      %s74 = sshll.u32 %s5, 4
      %s75 = int_to_ptr.hbm [resolvable:$true] %s74
      %s76 = sshll.u32 [#allocation9], 4
      %s77 = int_to_ptr.vmem [resolvable:$true] %s76
      %82 = dma.hbm_to_vmem [thread:$0]  %s75, 1024, %s77, [#allocation8], 64, 64, 4
    $region25: #{autoencoder_forward.1} parent=1 // pred_fallthru
      _
    // Predicated region
    $region26: #{autoencoder_forward.1} parent=1 // pred_check
      _
    $region27: #{autoencoder_forward.1} parent=1 // pred_check_branch
      %84 = sbr.rel (0) target = $region29
    $region28: #{autoencoder_forward.1} parent=1 // pred_region
      %86 = vsyncadd [#allocation11], 0
      %s88 = sshll.u32 %s6, 4
      %s89 = int_to_ptr.hbm [resolvable:$true] %s88
      %s90 = sshll.u32 [#allocation10], 4
      %s91 = int_to_ptr.vmem [resolvable:$true] %s90
      %93 = dma.hbm_to_vmem [thread:$0]  %s89, 512, %s91, [#allocation11]
    $region29: #{autoencoder_forward.1} parent=1 // pred_fallthru
      _
    // Predicated region
    $region30: #{autoencoder_forward.1} parent=1 // pred_check
      _
    $region31: #{autoencoder_forward.1} parent=1 // pred_check_branch
      %95 = sbr.rel (0) target = $region33
    $region32: #{autoencoder_forward.1} parent=1 // pred_region
      %97 = dma.done [#allocation3], 1024
    $region33: #{autoencoder_forward.1} parent=1 // pred_fallthru
      _
    // Predicated region
    $region34: #{autoencoder_forward.1} parent=1 // pred_check
      _
    $region35: #{autoencoder_forward.1} parent=1 // pred_check_branch
      %99 = sbr.rel (0) target = $region37
    $region36: #{autoencoder_forward.1} parent=1 // pred_region
      %101 = dma.done [#allocation5], 8192
    $region37: #{autoencoder_forward.1} parent=1 // pred_fallthru
      _
    // Predicated region
    $region38: #{autoencoder_forward.1} parent=1 // pred_check
      _
    $region39: #{autoencoder_forward.1} parent=1 // pred_check_branch
      %103 = sbr.rel (0) target = $region41
    $region40: #{autoencoder_forward.1} parent=1 // pred_region
      %105 = dma.done [#allocation5], 4096
    $region41: #{autoencoder_forward.1} parent=1 // pred_fallthru
      _
    // Predicated region
    $region42: #{autoencoder_forward.1} parent=1 // pred_check
      _
    $region43: #{autoencoder_forward.1} parent=1 // pred_check_branch
      %107 = sbr.rel (0) target = $region45
    $region44: #{autoencoder_forward.1} parent=1 // pred_region
      %109 = dma.done [#allocation8], 1024
    $region45: #{autoencoder_forward.1} parent=1 // pred_fallthru
      _
    // Predicated region
    $region46: #{autoencoder_forward.1} parent=1 // pred_check
      _
    $region47: #{autoencoder_forward.1} parent=1 // pred_check_branch
      %111 = sbr.rel (0) target = $region49
    $region48: #{autoencoder_forward.1} parent=1 // pred_region
      %113 = dma.done [#allocation8], 1024
    $region49: #{autoencoder_forward.1} parent=1 // pred_fallthru
      _
    // Predicated region
    $region50: #{autoencoder_forward.1} parent=1 // pred_check
      _
    $region51: #{autoencoder_forward.1} parent=1 // pred_check_branch
      %115 = sbr.rel (0) target = $region53
    $region52: #{autoencoder_forward.1} parent=1 // pred_region
      %117 = dma.done [#allocation11], 512
    $region53: #{autoencoder_forward.1} parent=1 // pred_fallthru
      _
    %v119 = vld [vmem:[#allocation10] ss:$8 sm:$0x3]
    %s120 = scalar_lea.vmem [#allocation10], 1
    %v121 = vld [vmem:[%s120] ss:$8 sm:$0xf]
    %v122 = vld [vmem:[#allocation10 + $0x2] ss:$0 sm:$0xff]
    %v123 = vld [vmem:[#allocation10 + $0xa] ss:$0 sm:$0xff]
    %v124 = vld [vmem:[#allocation10 + $0x12] ss:$0 sm:$0xff]
    %v125 = vld [vmem:[#allocation10 + $0x1a] ss:$0 sm:$0xff]
    %v126 = vld [vmem:[#allocation10 + $0x3] ss:$0 sm:$0xff]
    %v127 = vld [vmem:[#allocation10 + $0xb] ss:$0 sm:$0xff]
    %v128 = vld [vmem:[%s0] sm:$0xff]
    %v129 = vpack.c.bf16 %v128, %v128
    %v130 = vld [vmem:[#allocation2] sm:$0xff]
    %v131 = vld [vmem:[#allocation2 + $0x8] sm:$0xff]
    %v132 = vld [vmem:[#allocation2 + $0x10] sm:$0xff]
    %v133 = vld [vmem:[#allocation2 + $0x18] sm:$0xff]
    %v134 = vld [vmem:[#allocation2 + $0x20] sm:$0xff]
    %v135 = vld [vmem:[#allocation2 + $0x28] sm:$0xff]
    %v136 = vld [vmem:[#allocation2 + $0x30] sm:$0xff]
    %v137 = vld [vmem:[#allocation2 + $0x38] sm:$0xff]
    %v139 = vperm.slane %v119, 0
    %v140 = vperm.slane %v119, 1
    %v151 = vunpack.c.l.b16 %v130
    %v152 = vunpack.c.h.b16 %v130
    %v153 = vunpack.c.l.b16 %v131
    %v154 = vunpack.c.h.b16 %v131
    %v155 = vunpack.c.l.b16 %v132
    %v156 = vunpack.c.h.b16 %v132
    %v157 = vunpack.c.l.b16 %v133
    %v158 = vunpack.c.h.b16 %v133
    %v159 = vunpack.c.l.b16 %v134
    %v160 = vunpack.c.h.b16 %v134
    %v161 = vunpack.c.l.b16 %v135
    %v162 = vunpack.c.h.b16 %v135
    %v163 = vunpack.c.l.b16 %v136
    %v164 = vunpack.c.h.b16 %v136
    %v165 = vunpack.c.l.b16 %v137
    %v166 = vunpack.c.h.b16 %v137
    %v167 = vpack.c.b16 %v153, %v151
    %v168 = vpack.c.b16 %v154, %v152
    %v169 = vpack.c.b16 %v157, %v155
    %v170 = vpack.c.b16 %v158, %v156
    %v171 = vpack.c.b16 %v161, %v159
    %v172 = vpack.c.b16 %v162, %v160
    %v173 = vpack.c.b16 %v165, %v163
    %v174 = vpack.c.b16 %v166, %v164
    %vm183 = vcmask 523264
    %v185 = vsel %vm183, %v129, 0
    %187 = vmatpush.bf16.msra.mxu0 0
    %188 = vmatpush.bf16.msra.mxu0 0
    %189 = vmatpush.bf16.msra.mxu0 0
    %190 = vmatpush.bf16.msra.mxu0 0
    %191 = vmatpush.bf16.msra.mxu0 %v173
    %192 = vmatpush.bf16.msra.mxu0 %v171
    %193 = vmatpush.bf16.msra.mxu0 %v169
    %194 = vmatpush.bf16.msra.mxu0 %v167
    %195 = vmatmul.bf16.gmra.mxu0 %v185
    %v196 = vpop.f32.mrf.mxu0
    %v197 = vadd.f32 %v139, %v196
    %v198 = vpop.f32.mrf.mxu0
    %199 = vdwg.mxu0
    %200 = vmatpush.bf16.msra.mxu0 0
    %201 = vmatpush.bf16.msra.mxu0 0
    %202 = vmatpush.bf16.msra.mxu0 0
    %203 = vmatpush.bf16.msra.mxu0 0
    %204 = vmatpush.bf16.msra.mxu0 %v174
    %205 = vmatpush.bf16.msra.mxu0 %v172
    %206 = vmatpush.bf16.msra.mxu0 %v170
    %207 = vmatpush.bf16.msra.mxu0 %v168
    %208 = vmatmul.bf16.gmra.mxu0 %v185
    %v209 = vpop.f32.mrf.mxu0
    %v210 = vadd.f32 %v140, %v209
    %v211 = vpop.f32.mrf.mxu0
    %212 = vdwg.mxu0
    %v213 = vmax.f32 %v197, 0.0
    %v214 = vmax.f32 %v210, 0.0
    %v215 = vpack.c.bf16 %v213, %v213
    %v216 = vpack.c.bf16 %v214, %v214
    %v217 = vld [vmem:[#allocation4] sm:$0xff]
    %v218 = vld [vmem:[#allocation4 + $0x8] sm:$0xff]
    %v219 = vld [vmem:[#allocation4 + $0x10] sm:$0xff]
    %v220 = vld [vmem:[#allocation4 + $0x18] sm:$0xff]
    %v221 = vld [vmem:[#allocation4 + $0x20] sm:$0xff]
    %v222 = vld [vmem:[#allocation4 + $0x28] sm:$0xff]
    %v223 = vld [vmem:[#allocation4 + $0x30] sm:$0xff]
    %v224 = vld [vmem:[#allocation4 + $0x38] sm:$0xff]
    %v225 = vld [vmem:[#allocation4 + $0x40] sm:$0xff]
    %v226 = vld [vmem:[#allocation4 + $0x48] sm:$0xff]
    %v227 = vld [vmem:[#allocation4 + $0x50] sm:$0xff]
    %v228 = vld [vmem:[#allocation4 + $0x58] sm:$0xff]
    %v229 = vld [vmem:[#allocation4 + $0x60] sm:$0xff]
    %v230 = vld [vmem:[#allocation4 + $0x68] sm:$0xff]
    %v231 = vld [vmem:[#allocation4 + $0x70] sm:$0xff]
    %v232 = vld [vmem:[#allocation4 + $0x78] sm:$0xff]
    %v233 = vld [vmem:[#allocation4 + $0x80] sm:$0xff]
    %v234 = vld [vmem:[#allocation4 + $0x88] sm:$0xff]
    %v235 = vld [vmem:[#allocation4 + $0x90] sm:$0xff]
    %v236 = vld [vmem:[#allocation4 + $0x98] sm:$0xff]
    %v237 = vld [vmem:[#allocation4 + $0xa0] sm:$0xff]
    %v238 = vld [vmem:[#allocation4 + $0xa8] sm:$0xff]
    %v239 = vld [vmem:[#allocation4 + $0xb0] sm:$0xff]
    %v240 = vld [vmem:[#allocation4 + $0xb8] sm:$0xff]
    %v241 = vld [vmem:[#allocation4 + $0xc0] sm:$0xff]
    %v242 = vld [vmem:[#allocation4 + $0xc8] sm:$0xff]
    %v243 = vld [vmem:[#allocation4 + $0xd0] sm:$0xff]
    %v244 = vld [vmem:[#allocation4 + $0xd8] sm:$0xff]
    %v245 = vld [vmem:[#allocation4 + $0xe0] sm:$0xff]
    %v246 = vld [vmem:[#allocation4 + $0xe8] sm:$0xff]
    %v247 = vld [vmem:[#allocation4 + $0xf0] sm:$0xff]
    %v248 = vld [vmem:[#allocation4 + $0xf8] sm:$0xff]
    %v249 = vld [vmem:[#allocation4 + $0x100] sm:$0xff]
    %v250 = vld [vmem:[#allocation4 + $0x108] sm:$0xff]
    %v251 = vld [vmem:[#allocation4 + $0x110] sm:$0xff]
    %v252 = vld [vmem:[#allocation4 + $0x118] sm:$0xff]
    %v253 = vld [vmem:[#allocation4 + $0x120] sm:$0xff]
    %v254 = vld [vmem:[#allocation4 + $0x128] sm:$0xff]
    %v255 = vld [vmem:[#allocation4 + $0x130] sm:$0xff]
    %v256 = vld [vmem:[#allocation4 + $0x138] sm:$0xff]
    %v257 = vld [vmem:[#allocation4 + $0x140] sm:$0xff]
    %v258 = vld [vmem:[#allocation4 + $0x148] sm:$0xff]
    %v259 = vld [vmem:[#allocation4 + $0x150] sm:$0xff]
    %v260 = vld [vmem:[#allocation4 + $0x158] sm:$0xff]
    %v261 = vld [vmem:[#allocation4 + $0x160] sm:$0xff]
    %v262 = vld [vmem:[#allocation4 + $0x168] sm:$0xff]
    %v263 = vld [vmem:[#allocation4 + $0x170] sm:$0xff]
    %v264 = vld [vmem:[#allocation4 + $0x178] sm:$0xff]
    %v265 = vld [vmem:[#allocation4 + $0x180] sm:$0xff]
    %v266 = vld [vmem:[#allocation4 + $0x188] sm:$0xff]
    %v267 = vld [vmem:[#allocation4 + $0x190] sm:$0xff]
    %v268 = vld [vmem:[#allocation4 + $0x198] sm:$0xff]
    %v269 = vld [vmem:[#allocation4 + $0x1a0] sm:$0xff]
    %v270 = vld [vmem:[#allocation4 + $0x1a8] sm:$0xff]
    %v271 = vld [vmem:[#allocation4 + $0x1b0] sm:$0xff]
    %v272 = vld [vmem:[#allocation4 + $0x1b8] sm:$0xff]
    %v273 = vld [vmem:[#allocation4 + $0x1c0] sm:$0xff]
    %v274 = vld [vmem:[#allocation4 + $0x1c8] sm:$0xff]
    %v275 = vld [vmem:[#allocation4 + $0x1d0] sm:$0xff]
    %v276 = vld [vmem:[#allocation4 + $0x1d8] sm:$0xff]
    %v277 = vld [vmem:[#allocation4 + $0x1e0] sm:$0xff]
    %v278 = vld [vmem:[#allocation4 + $0x1e8] sm:$0xff]
    %v279 = vld [vmem:[#allocation4 + $0x1f0] sm:$0xff]
    %v280 = vld [vmem:[#allocation4 + $0x1f8] sm:$0xff]
    %v282 = vperm.slane %v121, 0
    %v283 = vperm.slane %v121, 1
    %v284 = vperm.slane %v121, 2
    %v285 = vperm.slane %v121, 3
    %v354 = vunpack.c.l.b16 %v217
    %v355 = vunpack.c.h.b16 %v217
    %v356 = vunpack.c.l.b16 %v218
    %v357 = vunpack.c.h.b16 %v218
    %v358 = vunpack.c.l.b16 %v219
    %v359 = vunpack.c.h.b16 %v219
    %v360 = vunpack.c.l.b16 %v220
    %v361 = vunpack.c.h.b16 %v220
    %v362 = vunpack.c.l.b16 %v221
    %v363 = vunpack.c.h.b16 %v221
    %v364 = vunpack.c.l.b16 %v222
    %v365 = vunpack.c.h.b16 %v222
    %v366 = vunpack.c.l.b16 %v223
    %v367 = vunpack.c.h.b16 %v223
    %v368 = vunpack.c.l.b16 %v224
    %v369 = vunpack.c.h.b16 %v224
    %v370 = vunpack.c.l.b16 %v225
    %v371 = vunpack.c.h.b16 %v225
    %v372 = vunpack.c.l.b16 %v226
    %v373 = vunpack.c.h.b16 %v226
    %v374 = vunpack.c.l.b16 %v227
    %v375 = vunpack.c.h.b16 %v227
    %v376 = vunpack.c.l.b16 %v228
    %v377 = vunpack.c.h.b16 %v228
    %v378 = vunpack.c.l.b16 %v229
    %v379 = vunpack.c.h.b16 %v229
    %v380 = vunpack.c.l.b16 %v230
    %v381 = vunpack.c.h.b16 %v230
    %v382 = vunpack.c.l.b16 %v231
    %v383 = vunpack.c.h.b16 %v231
    %v384 = vunpack.c.l.b16 %v232
    %v385 = vunpack.c.h.b16 %v232
    %v386 = vunpack.c.l.b16 %v233
    %v387 = vunpack.c.h.b16 %v233
    %v388 = vunpack.c.l.b16 %v234
    %v389 = vunpack.c.h.b16 %v234
    %v390 = vunpack.c.l.b16 %v235
    %v391 = vunpack.c.h.b16 %v235
    %v392 = vunpack.c.l.b16 %v236
    %v393 = vunpack.c.h.b16 %v236
    %v394 = vunpack.c.l.b16 %v237
    %v395 = vunpack.c.h.b16 %v237
    %v396 = vunpack.c.l.b16 %v238
    %v397 = vunpack.c.h.b16 %v238
    %v398 = vunpack.c.l.b16 %v239
    %v399 = vunpack.c.h.b16 %v239
    %v400 = vunpack.c.l.b16 %v240
    %v401 = vunpack.c.h.b16 %v240
    %v402 = vunpack.c.l.b16 %v241
    %v403 = vunpack.c.h.b16 %v241
    %v404 = vunpack.c.l.b16 %v242
    %v405 = vunpack.c.h.b16 %v242
    %v406 = vunpack.c.l.b16 %v243
    %v407 = vunpack.c.h.b16 %v243
    %v408 = vunpack.c.l.b16 %v244
    %v409 = vunpack.c.h.b16 %v244
    %v410 = vunpack.c.l.b16 %v245
    %v411 = vunpack.c.h.b16 %v245
    %v412 = vunpack.c.l.b16 %v246
    %v413 = vunpack.c.h.b16 %v246
    %v414 = vunpack.c.l.b16 %v247
    %v415 = vunpack.c.h.b16 %v247
    %v416 = vunpack.c.l.b16 %v248
    %v417 = vunpack.c.h.b16 %v248
    %v418 = vunpack.c.l.b16 %v249
    %v419 = vunpack.c.h.b16 %v249
    %v420 = vunpack.c.l.b16 %v250
    %v421 = vunpack.c.h.b16 %v250
    %v422 = vunpack.c.l.b16 %v251
    %v423 = vunpack.c.h.b16 %v251
    %v424 = vunpack.c.l.b16 %v252
    %v425 = vunpack.c.h.b16 %v252
    %v426 = vunpack.c.l.b16 %v253
    %v427 = vunpack.c.h.b16 %v253
    %v428 = vunpack.c.l.b16 %v254
    %v429 = vunpack.c.h.b16 %v254
    %v430 = vunpack.c.l.b16 %v255
    %v431 = vunpack.c.h.b16 %v255
    %v432 = vunpack.c.l.b16 %v256
    %v433 = vunpack.c.h.b16 %v256
    %v434 = vunpack.c.l.b16 %v257
    %v435 = vunpack.c.h.b16 %v257
    %v436 = vunpack.c.l.b16 %v258
    %v437 = vunpack.c.h.b16 %v258
    %v438 = vunpack.c.l.b16 %v259
    %v439 = vunpack.c.h.b16 %v259
    %v440 = vunpack.c.l.b16 %v260
    %v441 = vunpack.c.h.b16 %v260
    %v442 = vunpack.c.l.b16 %v261
    %v443 = vunpack.c.h.b16 %v261
    %v444 = vunpack.c.l.b16 %v262
    %v445 = vunpack.c.h.b16 %v262
    %v446 = vunpack.c.l.b16 %v263
    %v447 = vunpack.c.h.b16 %v263
    %v448 = vunpack.c.l.b16 %v264
    %v449 = vunpack.c.h.b16 %v264
    %v450 = vunpack.c.l.b16 %v265
    %v451 = vunpack.c.h.b16 %v265
    %v452 = vunpack.c.l.b16 %v266
    %v453 = vunpack.c.h.b16 %v266
    %v454 = vunpack.c.l.b16 %v267
    %v455 = vunpack.c.h.b16 %v267
    %v456 = vunpack.c.l.b16 %v268
    %v457 = vunpack.c.h.b16 %v268
    %v458 = vunpack.c.l.b16 %v269
    %v459 = vunpack.c.h.b16 %v269
    %v460 = vunpack.c.l.b16 %v270
    %v461 = vunpack.c.h.b16 %v270
    %v462 = vunpack.c.l.b16 %v271
    %v463 = vunpack.c.h.b16 %v271
    %v464 = vunpack.c.l.b16 %v272
    %v465 = vunpack.c.h.b16 %v272
    %v466 = vunpack.c.l.b16 %v273
    %v467 = vunpack.c.h.b16 %v273
    %v468 = vunpack.c.l.b16 %v274
    %v469 = vunpack.c.h.b16 %v274
    %v470 = vunpack.c.l.b16 %v275
    %v471 = vunpack.c.h.b16 %v275
    %v472 = vunpack.c.l.b16 %v276
    %v473 = vunpack.c.h.b16 %v276
    %v474 = vunpack.c.l.b16 %v277
    %v475 = vunpack.c.h.b16 %v277
    %v476 = vunpack.c.l.b16 %v278
    %v477 = vunpack.c.h.b16 %v278
    %v478 = vunpack.c.l.b16 %v279
    %v479 = vunpack.c.h.b16 %v279
    %v480 = vunpack.c.l.b16 %v280
    %v481 = vunpack.c.h.b16 %v280
    %v482 = vpack.c.b16 %v358, %v354
    %v483 = vpack.c.b16 %v359, %v355
    %v484 = vpack.c.b16 %v360, %v356
    %v485 = vpack.c.b16 %v361, %v357
    %v486 = vpack.c.b16 %v366, %v362
    %v487 = vpack.c.b16 %v367, %v363
    %v488 = vpack.c.b16 %v368, %v364
    %v489 = vpack.c.b16 %v369, %v365
    %v490 = vpack.c.b16 %v374, %v370
    %v491 = vpack.c.b16 %v375, %v371
    %v492 = vpack.c.b16 %v376, %v372
    %v493 = vpack.c.b16 %v377, %v373
    %v494 = vpack.c.b16 %v382, %v378
    %v495 = vpack.c.b16 %v383, %v379
    %v496 = vpack.c.b16 %v384, %v380
    %v497 = vpack.c.b16 %v385, %v381
    %v498 = vpack.c.b16 %v390, %v386
    %v499 = vpack.c.b16 %v391, %v387
    %v500 = vpack.c.b16 %v392, %v388
    %v501 = vpack.c.b16 %v393, %v389
    %v502 = vpack.c.b16 %v398, %v394
    %v503 = vpack.c.b16 %v399, %v395
    %v504 = vpack.c.b16 %v400, %v396
    %v505 = vpack.c.b16 %v401, %v397
    %v506 = vpack.c.b16 %v406, %v402
    %v507 = vpack.c.b16 %v407, %v403
    %v508 = vpack.c.b16 %v408, %v404
    %v509 = vpack.c.b16 %v409, %v405
    %v510 = vpack.c.b16 %v414, %v410
    %v511 = vpack.c.b16 %v415, %v411
    %v512 = vpack.c.b16 %v416, %v412
    %v513 = vpack.c.b16 %v417, %v413
    %v514 = vpack.c.b16 %v422, %v418
    %v515 = vpack.c.b16 %v423, %v419
    %v516 = vpack.c.b16 %v424, %v420
    %v517 = vpack.c.b16 %v425, %v421
    %v518 = vpack.c.b16 %v430, %v426
    %v519 = vpack.c.b16 %v431, %v427
    %v520 = vpack.c.b16 %v432, %v428
    %v521 = vpack.c.b16 %v433, %v429
    %v522 = vpack.c.b16 %v438, %v434
    %v523 = vpack.c.b16 %v439, %v435
    %v524 = vpack.c.b16 %v440, %v436
    %v525 = vpack.c.b16 %v441, %v437
    %v526 = vpack.c.b16 %v446, %v442
    %v527 = vpack.c.b16 %v447, %v443
    %v528 = vpack.c.b16 %v448, %v444
    %v529 = vpack.c.b16 %v449, %v445
    %v530 = vpack.c.b16 %v454, %v450
    %v531 = vpack.c.b16 %v455, %v451
    %v532 = vpack.c.b16 %v456, %v452
    %v533 = vpack.c.b16 %v457, %v453
    %v534 = vpack.c.b16 %v462, %v458
    %v535 = vpack.c.b16 %v463, %v459
    %v536 = vpack.c.b16 %v464, %v460
    %v537 = vpack.c.b16 %v465, %v461
    %v538 = vpack.c.b16 %v470, %v466
    %v539 = vpack.c.b16 %v471, %v467
    %v540 = vpack.c.b16 %v472, %v468
    %v541 = vpack.c.b16 %v473, %v469
    %v542 = vpack.c.b16 %v478, %v474
    %v543 = vpack.c.b16 %v479, %v475
    %v544 = vpack.c.b16 %v480, %v476
    %v545 = vpack.c.b16 %v481, %v477
    %610 = vmatpush.bf16.msra.mxu0 %v510
    %611 = vmatpush.bf16.msra.mxu0 %v506
    %612 = vmatpush.bf16.msra.mxu0 %v502
    %613 = vmatpush.bf16.msra.mxu0 %v498
    %614 = vmatpush.bf16.msra.mxu0 %v494
    %615 = vmatpush.bf16.msra.mxu0 %v490
    %616 = vmatpush.bf16.msra.mxu0 %v486
    %617 = vmatpush.bf16.msra.mxu0 %v482
    %618 = vmatmul.bf16.gmra.mxu0 %v215
    %v619 = vpop.f32.mrf.mxu0
    %v620 = vadd.f32 %v282, %v619
    %v621 = vpop.f32.mrf.mxu0
    %622 = vdwg.mxu0
    %623 = vmatpush.bf16.msra.mxu0 %v542
    %624 = vmatpush.bf16.msra.mxu0 %v538
    %625 = vmatpush.bf16.msra.mxu0 %v534
    %626 = vmatpush.bf16.msra.mxu0 %v530
    %627 = vmatpush.bf16.msra.mxu0 %v526
    %628 = vmatpush.bf16.msra.mxu0 %v522
    %629 = vmatpush.bf16.msra.mxu0 %v518
    %630 = vmatpush.bf16.msra.mxu0 %v514
    %631 = vmatmul.bf16.gmra.mxu0 %v216
    %v632 = vpop.f32.mrf.mxu0
    %v633 = vadd.f32 %v620, %v632
    %v634 = vpop.f32.mrf.mxu0
    %635 = vdwg.mxu0
    %636 = vmatpush.bf16.msra.mxu0 %v511
    %637 = vmatpush.bf16.msra.mxu0 %v507
    %638 = vmatpush.bf16.msra.mxu0 %v503
    %639 = vmatpush.bf16.msra.mxu0 %v499
    %640 = vmatpush.bf16.msra.mxu0 %v495
    %641 = vmatpush.bf16.msra.mxu0 %v491
    %642 = vmatpush.bf16.msra.mxu0 %v487
    %643 = vmatpush.bf16.msra.mxu0 %v483
    %644 = vmatmul.bf16.gmra.mxu0 %v215
    %v645 = vpop.f32.mrf.mxu0
    %v646 = vadd.f32 %v283, %v645
    %v647 = vpop.f32.mrf.mxu0
    %648 = vdwg.mxu0
    %649 = vmatpush.bf16.msra.mxu0 %v543
    %650 = vmatpush.bf16.msra.mxu0 %v539
    %651 = vmatpush.bf16.msra.mxu0 %v535
    %652 = vmatpush.bf16.msra.mxu0 %v531
    %653 = vmatpush.bf16.msra.mxu0 %v527
    %654 = vmatpush.bf16.msra.mxu0 %v523
    %655 = vmatpush.bf16.msra.mxu0 %v519
    %656 = vmatpush.bf16.msra.mxu0 %v515
    %657 = vmatmul.bf16.gmra.mxu0 %v216
    %v658 = vpop.f32.mrf.mxu0
    %v659 = vadd.f32 %v646, %v658
    %v660 = vpop.f32.mrf.mxu0
    %661 = vdwg.mxu0
    %662 = vmatpush.bf16.msra.mxu0 %v512
    %663 = vmatpush.bf16.msra.mxu0 %v508
    %664 = vmatpush.bf16.msra.mxu0 %v504
    %665 = vmatpush.bf16.msra.mxu0 %v500
    %666 = vmatpush.bf16.msra.mxu0 %v496
    %667 = vmatpush.bf16.msra.mxu0 %v492
    %668 = vmatpush.bf16.msra.mxu0 %v488
    %669 = vmatpush.bf16.msra.mxu0 %v484
    %670 = vmatmul.bf16.gmra.mxu0 %v215
    %v671 = vpop.f32.mrf.mxu0
    %v672 = vadd.f32 %v284, %v671
    %v673 = vpop.f32.mrf.mxu0
    %674 = vdwg.mxu0
    %675 = vmatpush.bf16.msra.mxu0 %v544
    %676 = vmatpush.bf16.msra.mxu0 %v540
    %677 = vmatpush.bf16.msra.mxu0 %v536
    %678 = vmatpush.bf16.msra.mxu0 %v532
    %679 = vmatpush.bf16.msra.mxu0 %v528
    %680 = vmatpush.bf16.msra.mxu0 %v524
    %681 = vmatpush.bf16.msra.mxu0 %v520
    %682 = vmatpush.bf16.msra.mxu0 %v516
    %683 = vmatmul.bf16.gmra.mxu0 %v216
    %v684 = vpop.f32.mrf.mxu0
    %v685 = vadd.f32 %v672, %v684
    %v686 = vpop.f32.mrf.mxu0
    %687 = vdwg.mxu0
    %688 = vmatpush.bf16.msra.mxu0 %v513
    %689 = vmatpush.bf16.msra.mxu0 %v509
    %690 = vmatpush.bf16.msra.mxu0 %v505
    %691 = vmatpush.bf16.msra.mxu0 %v501
    %692 = vmatpush.bf16.msra.mxu0 %v497
    %693 = vmatpush.bf16.msra.mxu0 %v493
    %694 = vmatpush.bf16.msra.mxu0 %v489
    %695 = vmatpush.bf16.msra.mxu0 %v485
    %696 = vmatmul.bf16.gmra.mxu0 %v215
    %v697 = vpop.f32.mrf.mxu0
    %v698 = vadd.f32 %v285, %v697
    %v699 = vpop.f32.mrf.mxu0
    %700 = vdwg.mxu0
    %701 = vmatpush.bf16.msra.mxu0 %v545
    %702 = vmatpush.bf16.msra.mxu0 %v541
    %703 = vmatpush.bf16.msra.mxu0 %v537
    %704 = vmatpush.bf16.msra.mxu0 %v533
    %705 = vmatpush.bf16.msra.mxu0 %v529
    %706 = vmatpush.bf16.msra.mxu0 %v525
    %707 = vmatpush.bf16.msra.mxu0 %v521
    %708 = vmatpush.bf16.msra.mxu0 %v517
    %709 = vmatmul.bf16.gmra.mxu0 %v216
    %v710 = vpop.f32.mrf.mxu0
    %v711 = vadd.f32 %v698, %v710
    %v712 = vpop.f32.mrf.mxu0
    %713 = vdwg.mxu0
    %v714 = vmax.f32 %v633, 0.0
    %v715 = vmax.f32 %v659, 0.0
    %v716 = vmax.f32 %v685, 0.0
    %v717 = vmax.f32 %v711, 0.0
    %v718 = vpack.c.bf16 %v714, %v714
    %v719 = vpack.c.bf16 %v715, %v715
    %v720 = vpack.c.bf16 %v716, %v716
    %v721 = vpack.c.bf16 %v717, %v717
    %v722 = vld [vmem:[#allocation6] sm:$0xf]
    %v723 = vld [vmem:[#allocation6 + $0x4] sm:$0xf]
    %v724 = vld [vmem:[#allocation6 + $0x8] sm:$0xf]
    %v725 = vld [vmem:[#allocation6 + $0xc] sm:$0xf]
    %v726 = vld [vmem:[#allocation6 + $0x10] sm:$0xf]
    %v727 = vld [vmem:[#allocation6 + $0x14] sm:$0xf]
    %v728 = vld [vmem:[#allocation6 + $0x18] sm:$0xf]
    %v729 = vld [vmem:[#allocation6 + $0x1c] sm:$0xf]
    %v730 = vld [vmem:[#allocation6 + $0x20] sm:$0xf]
    %v731 = vld [vmem:[#allocation6 + $0x24] sm:$0xf]
    %v732 = vld [vmem:[#allocation6 + $0x28] sm:$0xf]
    %v733 = vld [vmem:[#allocation6 + $0x2c] sm:$0xf]
    %v734 = vld [vmem:[#allocation6 + $0x30] sm:$0xf]
    %v735 = vld [vmem:[#allocation6 + $0x34] sm:$0xf]
    %v736 = vld [vmem:[#allocation6 + $0x38] sm:$0xf]
    %v737 = vld [vmem:[#allocation6 + $0x3c] sm:$0xf]
    %v738 = vld [vmem:[#allocation6 + $0x40] sm:$0xf]
    %v739 = vld [vmem:[#allocation6 + $0x44] sm:$0xf]
    %v740 = vld [vmem:[#allocation6 + $0x48] sm:$0xf]
    %v741 = vld [vmem:[#allocation6 + $0x4c] sm:$0xf]
    %v742 = vld [vmem:[#allocation6 + $0x50] sm:$0xf]
    %v743 = vld [vmem:[#allocation6 + $0x54] sm:$0xf]
    %v744 = vld [vmem:[#allocation6 + $0x58] sm:$0xf]
    %v745 = vld [vmem:[#allocation6 + $0x5c] sm:$0xf]
    %v746 = vld [vmem:[#allocation6 + $0x60] sm:$0xf]
    %v747 = vld [vmem:[#allocation6 + $0x64] sm:$0xf]
    %v748 = vld [vmem:[#allocation6 + $0x68] sm:$0xf]
    %v749 = vld [vmem:[#allocation6 + $0x6c] sm:$0xf]
    %v750 = vld [vmem:[#allocation6 + $0x70] sm:$0xf]
    %v751 = vld [vmem:[#allocation6 + $0x74] sm:$0xf]
    %v752 = vld [vmem:[#allocation6 + $0x78] sm:$0xf]
    %v753 = vld [vmem:[#allocation6 + $0x7c] sm:$0xf]
    %v754 = vld [vmem:[#allocation6 + $0x80] sm:$0xf]
    %v755 = vld [vmem:[#allocation6 + $0x84] sm:$0xf]
    %v756 = vld [vmem:[#allocation6 + $0x88] sm:$0xf]
    %v757 = vld [vmem:[#allocation6 + $0x8c] sm:$0xf]
    %v758 = vld [vmem:[#allocation6 + $0x90] sm:$0xf]
    %v759 = vld [vmem:[#allocation6 + $0x94] sm:$0xf]
    %v760 = vld [vmem:[#allocation6 + $0x98] sm:$0xf]
    %v761 = vld [vmem:[#allocation6 + $0x9c] sm:$0xf]
    %v762 = vld [vmem:[#allocation6 + $0xa0] sm:$0xf]
    %v763 = vld [vmem:[#allocation6 + $0xa4] sm:$0xf]
    %v764 = vld [vmem:[#allocation6 + $0xa8] sm:$0xf]
    %v765 = vld [vmem:[#allocation6 + $0xac] sm:$0xf]
    %v766 = vld [vmem:[#allocation6 + $0xb0] sm:$0xf]
    %v767 = vld [vmem:[#allocation6 + $0xb4] sm:$0xf]
    %v768 = vld [vmem:[#allocation6 + $0xb8] sm:$0xf]
    %v769 = vld [vmem:[#allocation6 + $0xbc] sm:$0xf]
    %v770 = vld [vmem:[#allocation6 + $0xc0] sm:$0xf]
    %v771 = vld [vmem:[#allocation6 + $0xc4] sm:$0xf]
    %v772 = vld [vmem:[#allocation6 + $0xc8] sm:$0xf]
    %v773 = vld [vmem:[#allocation6 + $0xcc] sm:$0xf]
    %v774 = vld [vmem:[#allocation6 + $0xd0] sm:$0xf]
    %v775 = vld [vmem:[#allocation6 + $0xd4] sm:$0xf]
    %v776 = vld [vmem:[#allocation6 + $0xd8] sm:$0xf]
    %v777 = vld [vmem:[#allocation6 + $0xdc] sm:$0xf]
    %v778 = vld [vmem:[#allocation6 + $0xe0] sm:$0xf]
    %v779 = vld [vmem:[#allocation6 + $0xe4] sm:$0xf]
    %v780 = vld [vmem:[#allocation6 + $0xe8] sm:$0xf]
    %v781 = vld [vmem:[#allocation6 + $0xec] sm:$0xf]
    %v782 = vld [vmem:[#allocation6 + $0xf0] sm:$0xf]
    %v783 = vld [vmem:[#allocation6 + $0xf4] sm:$0xf]
    %v784 = vld [vmem:[#allocation6 + $0xf8] sm:$0xf]
    %v785 = vld [vmem:[#allocation6 + $0xfc] sm:$0xf]
    %v850 = vunpack.c.l.b16 %v722
    %v851 = vunpack.c.l.b16 %v723
    %v852 = vunpack.c.l.b16 %v724
    %v853 = vunpack.c.l.b16 %v725
    %v854 = vunpack.c.l.b16 %v726
    %v855 = vunpack.c.l.b16 %v727
    %v856 = vunpack.c.l.b16 %v728
    %v857 = vunpack.c.l.b16 %v729
    %v858 = vunpack.c.l.b16 %v730
    %v859 = vunpack.c.l.b16 %v731
    %v860 = vunpack.c.l.b16 %v732
    %v861 = vunpack.c.l.b16 %v733
    %v862 = vunpack.c.l.b16 %v734
    %v863 = vunpack.c.l.b16 %v735
    %v864 = vunpack.c.l.b16 %v736
    %v865 = vunpack.c.l.b16 %v737
    %v866 = vunpack.c.l.b16 %v738
    %v867 = vunpack.c.l.b16 %v739
    %v868 = vunpack.c.l.b16 %v740
    %v869 = vunpack.c.l.b16 %v741
    %v870 = vunpack.c.l.b16 %v742
    %v871 = vunpack.c.l.b16 %v743
    %v872 = vunpack.c.l.b16 %v744
    %v873 = vunpack.c.l.b16 %v745
    %v874 = vunpack.c.l.b16 %v746
    %v875 = vunpack.c.l.b16 %v747
    %v876 = vunpack.c.l.b16 %v748
    %v877 = vunpack.c.l.b16 %v749
    %v878 = vunpack.c.l.b16 %v750
    %v879 = vunpack.c.l.b16 %v751
    %v880 = vunpack.c.l.b16 %v752
    %v881 = vunpack.c.l.b16 %v753
    %v882 = vunpack.c.l.b16 %v754
    %v883 = vunpack.c.l.b16 %v755
    %v884 = vunpack.c.l.b16 %v756
    %v885 = vunpack.c.l.b16 %v757
    %v886 = vunpack.c.l.b16 %v758
    %v887 = vunpack.c.l.b16 %v759
    %v888 = vunpack.c.l.b16 %v760
    %v889 = vunpack.c.l.b16 %v761
    %v890 = vunpack.c.l.b16 %v762
    %v891 = vunpack.c.l.b16 %v763
    %v892 = vunpack.c.l.b16 %v764
    %v893 = vunpack.c.l.b16 %v765
    %v894 = vunpack.c.l.b16 %v766
    %v895 = vunpack.c.l.b16 %v767
    %v896 = vunpack.c.l.b16 %v768
    %v897 = vunpack.c.l.b16 %v769
    %v898 = vunpack.c.l.b16 %v770
    %v899 = vunpack.c.l.b16 %v771
    %v900 = vunpack.c.l.b16 %v772
    %v901 = vunpack.c.l.b16 %v773
    %v902 = vunpack.c.l.b16 %v774
    %v903 = vunpack.c.l.b16 %v775
    %v904 = vunpack.c.l.b16 %v776
    %v905 = vunpack.c.l.b16 %v777
    %v906 = vunpack.c.l.b16 %v778
    %v907 = vunpack.c.l.b16 %v779
    %v908 = vunpack.c.l.b16 %v780
    %v909 = vunpack.c.l.b16 %v781
    %v910 = vunpack.c.l.b16 %v782
    %v911 = vunpack.c.l.b16 %v783
    %v912 = vunpack.c.l.b16 %v784
    %v913 = vunpack.c.l.b16 %v785
    %v914 = vpack.c.b16 %v851, %v850
    %v915 = vpack.c.b16 %v853, %v852
    %v916 = vpack.c.b16 %v855, %v854
    %v917 = vpack.c.b16 %v857, %v856
    %v918 = vpack.c.b16 %v859, %v858
    %v919 = vpack.c.b16 %v861, %v860
    %v920 = vpack.c.b16 %v863, %v862
    %v921 = vpack.c.b16 %v865, %v864
    %v922 = vpack.c.b16 %v867, %v866
    %v923 = vpack.c.b16 %v869, %v868
    %v924 = vpack.c.b16 %v871, %v870
    %v925 = vpack.c.b16 %v873, %v872
    %v926 = vpack.c.b16 %v875, %v874
    %v927 = vpack.c.b16 %v877, %v876
    %v928 = vpack.c.b16 %v879, %v878
    %v929 = vpack.c.b16 %v881, %v880
    %v930 = vpack.c.b16 %v883, %v882
    %v931 = vpack.c.b16 %v885, %v884
    %v932 = vpack.c.b16 %v887, %v886
    %v933 = vpack.c.b16 %v889, %v888
    %v934 = vpack.c.b16 %v891, %v890
    %v935 = vpack.c.b16 %v893, %v892
    %v936 = vpack.c.b16 %v895, %v894
    %v937 = vpack.c.b16 %v897, %v896
    %v938 = vpack.c.b16 %v899, %v898
    %v939 = vpack.c.b16 %v901, %v900
    %v940 = vpack.c.b16 %v903, %v902
    %v941 = vpack.c.b16 %v905, %v904
    %v942 = vpack.c.b16 %v907, %v906
    %v943 = vpack.c.b16 %v909, %v908
    %v944 = vpack.c.b16 %v911, %v910
    %v945 = vpack.c.b16 %v913, %v912
    %978 = vmatpush.bf16.msra.mxu0 %v921
    %979 = vmatpush.bf16.msra.mxu0 %v920
    %980 = vmatpush.bf16.msra.mxu0 %v919
    %981 = vmatpush.bf16.msra.mxu0 %v918
    %982 = vmatpush.bf16.msra.mxu0 %v917
    %983 = vmatpush.bf16.msra.mxu0 %v916
    %984 = vmatpush.bf16.msra.mxu0 %v915
    %985 = vmatpush.bf16.msra.mxu0 %v914
    %986 = vmatmul.bf16.gmra.mxu0 %v718
    %v987 = vpop.f32.mrf.mxu0
    %v988 = vadd.f32 %v122, %v987
    %v989 = vpop.f32.mrf.mxu0
    %990 = vdwg.mxu0
    %991 = vmatpush.bf16.msra.mxu0 %v929
    %992 = vmatpush.bf16.msra.mxu0 %v928
    %993 = vmatpush.bf16.msra.mxu0 %v927
    %994 = vmatpush.bf16.msra.mxu0 %v926
    %995 = vmatpush.bf16.msra.mxu0 %v925
    %996 = vmatpush.bf16.msra.mxu0 %v924
    %997 = vmatpush.bf16.msra.mxu0 %v923
    %998 = vmatpush.bf16.msra.mxu0 %v922
    %999 = vmatmul.bf16.gmra.mxu0 %v719
    %v1000 = vpop.f32.mrf.mxu0
    %v1001 = vadd.f32 %v988, %v1000
    %v1002 = vpop.f32.mrf.mxu0
    %1003 = vdwg.mxu0
    %1004 = vmatpush.bf16.msra.mxu0 %v937
    %1005 = vmatpush.bf16.msra.mxu0 %v936
    %1006 = vmatpush.bf16.msra.mxu0 %v935
    %1007 = vmatpush.bf16.msra.mxu0 %v934
    %1008 = vmatpush.bf16.msra.mxu0 %v933
    %1009 = vmatpush.bf16.msra.mxu0 %v932
    %1010 = vmatpush.bf16.msra.mxu0 %v931
    %1011 = vmatpush.bf16.msra.mxu0 %v930
    %1012 = vmatmul.bf16.gmra.mxu0 %v720
    %v1013 = vpop.f32.mrf.mxu0
    %v1014 = vadd.f32 %v1001, %v1013
    %v1015 = vpop.f32.mrf.mxu0
    %1016 = vdwg.mxu0
    %1017 = vmatpush.bf16.msra.mxu0 %v945
    %1018 = vmatpush.bf16.msra.mxu0 %v944
    %1019 = vmatpush.bf16.msra.mxu0 %v943
    %1020 = vmatpush.bf16.msra.mxu0 %v942
    %1021 = vmatpush.bf16.msra.mxu0 %v941
    %1022 = vmatpush.bf16.msra.mxu0 %v940
    %1023 = vmatpush.bf16.msra.mxu0 %v939
    %1024 = vmatpush.bf16.msra.mxu0 %v938
    %1025 = vmatmul.bf16.gmra.mxu0 %v721
    %v1026 = vpop.f32.mrf.mxu0
    %v1027 = vadd.f32 %v1014, %v1026
    %v1028 = vpop.f32.mrf.mxu0
    %1029 = vdwg.mxu0
    %v1030 = vmax.f32 %v1027, 0.0
    %v1031 = vmul.f32 %v1030, %v123
    %v1032 = vadd.f32 %v1031, %v124
    %v1033 = vpack.c.bf16 %v1032, %v1032
    %v1034 = vld [vmem:[#allocation7] sm:$0xf]
    %v1035 = vld [vmem:[#allocation7 + $0x4] sm:$0xf]
    %v1036 = vld [vmem:[#allocation7 + $0x8] sm:$0xf]
    %v1037 = vld [vmem:[#allocation7 + $0xc] sm:$0xf]
    %v1038 = vld [vmem:[#allocation7 + $0x10] sm:$0xf]
    %v1039 = vld [vmem:[#allocation7 + $0x14] sm:$0xf]
    %v1040 = vld [vmem:[#allocation7 + $0x18] sm:$0xf]
    %v1041 = vld [vmem:[#allocation7 + $0x1c] sm:$0xf]
    %v1042 = vld [vmem:[#allocation7 + $0x20] sm:$0xf]
    %v1043 = vld [vmem:[#allocation7 + $0x24] sm:$0xf]
    %v1044 = vld [vmem:[#allocation7 + $0x28] sm:$0xf]
    %v1045 = vld [vmem:[#allocation7 + $0x2c] sm:$0xf]
    %v1046 = vld [vmem:[#allocation7 + $0x30] sm:$0xf]
    %v1047 = vld [vmem:[#allocation7 + $0x34] sm:$0xf]
    %v1048 = vld [vmem:[#allocation7 + $0x38] sm:$0xf]
    %v1049 = vld [vmem:[#allocation7 + $0x3c] sm:$0xf]
    %v1066 = vunpack.c.l.b16 %v1034
    %v1067 = vunpack.c.l.b16 %v1035
    %v1068 = vunpack.c.l.b16 %v1036
    %v1069 = vunpack.c.l.b16 %v1037
    %v1070 = vunpack.c.l.b16 %v1038
    %v1071 = vunpack.c.l.b16 %v1039
    %v1072 = vunpack.c.l.b16 %v1040
    %v1073 = vunpack.c.l.b16 %v1041
    %v1074 = vunpack.c.l.b16 %v1042
    %v1075 = vunpack.c.l.b16 %v1043
    %v1076 = vunpack.c.l.b16 %v1044
    %v1077 = vunpack.c.l.b16 %v1045
    %v1078 = vunpack.c.l.b16 %v1046
    %v1079 = vunpack.c.l.b16 %v1047
    %v1080 = vunpack.c.l.b16 %v1048
    %v1081 = vunpack.c.l.b16 %v1049
    %v1082 = vpack.c.b16 %v1067, %v1066
    %v1083 = vpack.c.b16 %v1069, %v1068
    %v1084 = vpack.c.b16 %v1071, %v1070
    %v1085 = vpack.c.b16 %v1073, %v1072
    %v1086 = vpack.c.b16 %v1075, %v1074
    %v1087 = vpack.c.b16 %v1077, %v1076
    %v1088 = vpack.c.b16 %v1079, %v1078
    %v1089 = vpack.c.b16 %v1081, %v1080
    %1098 = vmatpush.bf16.msra.mxu0 %v1089
    %1099 = vmatpush.bf16.msra.mxu0 %v1088
    %1100 = vmatpush.bf16.msra.mxu0 %v1087
    %1101 = vmatpush.bf16.msra.mxu0 %v1086
    %1102 = vmatpush.bf16.msra.mxu0 %v1085
    %1103 = vmatpush.bf16.msra.mxu0 %v1084
    %1104 = vmatpush.bf16.msra.mxu0 %v1083
    %1105 = vmatpush.bf16.msra.mxu0 %v1082
    %1106 = vmatmul.bf16.gmra.mxu0 %v1033
    %v1107 = vpop.f32.mrf.mxu0
    %v1108 = vadd.f32 %v125, %v1107
    %v1109 = vpop.f32.mrf.mxu0
    %1110 = vdwg.mxu0
    %v1111 = vmax.f32 %v1108, %v126
    %v1112 = vpack.c.bf16 %v1111, %v1111
    %v1113 = vld [vmem:[#allocation9] sm:$0xf]
    %v1114 = vld [vmem:[#allocation9 + $0x4] sm:$0xf]
    %v1115 = vld [vmem:[#allocation9 + $0x8] sm:$0xf]
    %v1116 = vld [vmem:[#allocation9 + $0xc] sm:$0xf]
    %v1117 = vld [vmem:[#allocation9 + $0x10] sm:$0xf]
    %v1118 = vld [vmem:[#allocation9 + $0x14] sm:$0xf]
    %v1119 = vld [vmem:[#allocation9 + $0x18] sm:$0xf]
    %v1120 = vld [vmem:[#allocation9 + $0x1c] sm:$0xf]
    %v1121 = vld [vmem:[#allocation9 + $0x20] sm:$0xf]
    %v1122 = vld [vmem:[#allocation9 + $0x24] sm:$0xf]
    %v1123 = vld [vmem:[#allocation9 + $0x28] sm:$0xf]
    %v1124 = vld [vmem:[#allocation9 + $0x2c] sm:$0xf]
    %v1125 = vld [vmem:[#allocation9 + $0x30] sm:$0xf]
    %v1126 = vld [vmem:[#allocation9 + $0x34] sm:$0xf]
    %v1127 = vld [vmem:[#allocation9 + $0x38] sm:$0xf]
    %v1128 = vld [vmem:[#allocation9 + $0x3c] sm:$0xf]
    %v1145 = vunpack.c.l.b16 %v1113
    %v1146 = vunpack.c.l.b16 %v1114
    %v1147 = vunpack.c.l.b16 %v1115
    %v1148 = vunpack.c.l.b16 %v1116
    %v1149 = vunpack.c.l.b16 %v1117
    %v1150 = vunpack.c.l.b16 %v1118
    %v1151 = vunpack.c.l.b16 %v1119
    %v1152 = vunpack.c.l.b16 %v1120
    %v1153 = vunpack.c.l.b16 %v1121
    %v1154 = vunpack.c.l.b16 %v1122
    %v1155 = vunpack.c.l.b16 %v1123
    %v1156 = vunpack.c.l.b16 %v1124
    %v1157 = vunpack.c.l.b16 %v1125
    %v1158 = vunpack.c.l.b16 %v1126
    %v1159 = vunpack.c.l.b16 %v1127
    %v1160 = vunpack.c.l.b16 %v1128
    %v1161 = vpack.c.b16 %v1146, %v1145
    %v1162 = vpack.c.b16 %v1148, %v1147
    %v1163 = vpack.c.b16 %v1150, %v1149
    %v1164 = vpack.c.b16 %v1152, %v1151
    %v1165 = vpack.c.b16 %v1154, %v1153
    %v1166 = vpack.c.b16 %v1156, %v1155
    %v1167 = vpack.c.b16 %v1158, %v1157
    %v1168 = vpack.c.b16 %v1160, %v1159
    %1177 = vmatpush.bf16.msra.mxu0 %v1168
    %1178 = vmatpush.bf16.msra.mxu0 %v1167
    %1179 = vmatpush.bf16.msra.mxu0 %v1166
    %1180 = vmatpush.bf16.msra.mxu0 %v1165
    %1181 = vmatpush.bf16.msra.mxu0 %v1164
    %1182 = vmatpush.bf16.msra.mxu0 %v1163
    %1183 = vmatpush.bf16.msra.mxu0 %v1162
    %1184 = vmatpush.bf16.msra.mxu0 %v1161
    %1185 = vmatmul.bf16.gmra.mxu0 %v1112
    %v1186 = vpop.f32.mrf.mxu0
    %v1187 = vadd.f32 %v127, %v1186
    %v1188 = vpop.f32.mrf.mxu0
    %1189 = vdwg.mxu0
    %1190 = vst [vmem:[%s7] sm:$0xff] %v1187
    // Predicated region
    $region54: #{autoencoder_forward.1} parent=1 // pred_check
      _
    $region55: #{autoencoder_forward.1} parent=1 // pred_check_branch
      %1192 = sbr.rel (0) target = $region57
    $region56: #{autoencoder_forward.1} parent=1 // pred_region
      _
    $region57: #{autoencoder_forward.1} parent=1 // pred_fallthru
      _
    // Predicated region
    $region58: #{autoencoder_forward.1} parent=1 // pred_check
      _
    $region59: #{autoencoder_forward.1} parent=1 // pred_check_branch
      %1194 = sbr.rel (0) target = $region61
    $region60: #{autoencoder_forward.1} parent=1 // pred_region
      _
    $region61: #{autoencoder_forward.1} parent=1 // pred_fallthru
      _
    %1195 = vsyncpa [#allocation3], 1
    %1196 = vsyncpa [#allocation5], 1
    %1197 = vsyncpa [#allocation8], 1
    %1198 = vsyncpa [#allocation11], 1

</llo_original>
